<compile_context>
chip_gen: v5e
topology: v5e:2x2
jax: 0.10.0
libtpu: 0.0.40
codegen_flags: <defaults>
</compile_context>

<pallas_src>
import jax
import jax.numpy as jnp
from jax.experimental import pallas as pl
from jax.experimental.pallas import tpu as pltpu

LEAKY_SLOPE = 0.01  # PyTorch nn.LeakyReLU default negative_slope
_LANE = 128


def _round_up(n, m):
    return (n + m - 1) // m * m


# ---------------------------------------------------------------------------
# Kernel
# ---------------------------------------------------------------------------
def _make_kernel(layer_meta):
    """layer_meta: tuple of (in_pad, out_pad, w_col_off, b_col_off, activation)."""
    n_layers = len(layer_meta)

    def kernel(x_ref, w_ref, b_ref, out_ref):
        h = x_ref[...]  # bf16 [TB, in_pad0]
        z = None
        for idx, (in_p, out_p, woff, boff, act) in enumerate(layer_meta):
            # Full-lane, full-sublane static slices (offsets are multiples of 128).
            w = w_ref[0:in_p, woff:woff + out_p]   # bf16 [in_p, out_p]
            b = b_ref[0:1, boff:boff + out_p]      # f32  [1, out_p]
            z = jnp.dot(h, w, preferred_element_type=jnp.float32) + b
            if act == "leaky":
                z = jnp.maximum(z, LEAKY_SLOPE * z)   # single VPU op
            elif act == "relu":
                z = jnp.maximum(z, 0.0)
            if idx + 1 < n_layers:
                h = z.astype(jnp.bfloat16)            # bf16 operand for next MXU dot
        out_ref[...] = z                              # single lane-dense [TB,128k] store

    return kernel


# ---------------------------------------------------------------------------
# Parameter packing (done once, outside the kernel hot path)
# ---------------------------------------------------------------------------
def pack_params(params):
    """Fuse per-task heads and pack everything into one weight slab + one bias slab,
    with every layer padded to full 128-lane / 128-sublane tiles."""
    shared = params["shared"]                       # list of (W [in,out], b [1,out])
    wt1, bt1 = params["wt1"], params["bt1"]         # [T, h_last, s1], [T, 1, s1]
    wt2, bt2 = params["wt2"], params["bt2"]         # [T, s1, s2],    [T, 1, s2]
    wf, bf = params["wf"], params["bf"]             # [T, s2, 1],     [T, 1, 1]
    T, _h_last, s1 = wt1.shape
    s2 = wt2.shape[2]

    # ---- fuse per-task heads into 3 wide layers ----
    # head layer 1: concat over tasks along output axis -> [h_last, T*s1]
    w_h1 = jnp.concatenate([wt1[t] for t in range(T)], axis=1)
    b_h1 = jnp.concatenate([bt1[t] for t in range(T)], axis=1)
    # head layer 2: block-diagonal -> [T*s1, T*s2]
    w_h2 = jnp.zeros((T * s1, T * s2), wt2.dtype)
    for t in range(T):
        w_h2 = w_h2.at[t * s1:(t + 1) * s1, t * s2:(t + 1) * s2].set(wt2[t])
    b_h2 = jnp.concatenate([bt2[t] for t in range(T)], axis=1)
    # final layer: block-diagonal -> [T*s2, T]
    w_f = jnp.zeros((T * s2, T), wf.dtype)
    for t in range(T):
        w_f = w_f.at[t * s2:(t + 1) * s2, t:t + 1].set(wf[t])
    b_f = jnp.concatenate([bf[t] for t in range(T)], axis=1)

    mats = [w for (w, _) in shared] + [w_h1, w_h2, w_f]
    biases = [b for (_, b) in shared] + [b_h1, b_h2, b_f]
    acts = ["leaky"] * len(shared) + ["relu", "relu", "none"]

    # ---- pack into slabs: one bf16 weight slab, one f32 bias slab ----
    # Uniform full-lane padding: each layer occupies round_up(out_d,128) cols and
    # round_up(in_d,128) rows (zero-padded). Zero rows/cols are exact no-ops.
    rows = max(_round_up(m.shape[0], _LANE) for m in mats)
    layer_meta = []
    wcols = 0
    for m, a in zip(mats, acts):
        in_d, out_d = m.shape
        in_p = _round_up(in_d, _LANE)
        out_p = _round_up(out_d, _LANE)
        layer_meta.append((in_p, out_p, wcols, wcols, a))
        wcols += out_p

    w_slab = jnp.zeros((rows, wcols), jnp.bfloat16)
    b_slab = jnp.zeros((1, wcols), jnp.float32)
    for m, b, (in_p, out_p, woff, boff, _a) in zip(mats, biases, layer_meta):
        in_d, out_d = m.shape
        w_slab = w_slab.at[:in_d, woff:woff + out_d].set(m.astype(jnp.bfloat16))
        b_slab = b_slab.at[:, boff:boff + out_d].set(b.astype(jnp.float32))

    return {
        "w_slab": w_slab,
        "b_slab": b_slab,
        "layer_meta": tuple(layer_meta),
        "num_tasks": T,
        "in0_dim": mats[0].shape[0],
        "in0_pad": layer_meta[0][0],
        "out_pad": layer_meta[-1][1],
    }


# ---------------------------------------------------------------------------
# Forward
# ---------------------------------------------------------------------------
def multitask_spec_forward(x, packed, *, batch_tile=128):
    """Runs the full MultiTaskSpec forward (eval mode) in one Pallas kernel.

    Returns a single [batch, num_tasks] f32 array (column t == PyTorch task-t
    output). Callers needing the PyTorch list format can split it outside the
    hot path: [out[:, t:t+1] for t in range(num_tasks)].
    """
    B, in_dim = x.shape
    T = packed["num_tasks"]
    in0_pad = packed["in0_pad"]
    out_pad = packed["out_pad"]
    w_slab = packed["w_slab"]
    b_slab = packed["b_slab"]

    # Batch tile: multiple of 16 (bf16 sublane pack), capped by batch_tile.
    # NOTE: on v5e keep batch_tile <= ~4096 (16 MiB scoped VMEM default);
    # on v6e/v7x 256..1024+ is ideal for the 256-wide MXU.
    TB = min(batch_tile, _round_up(B, 16))
    Bp = _round_up(B, TB)

    # Zero-pad batch to a tile multiple and features to the padded K of layer 0.
    xb = jnp.pad(x.astype(jnp.bfloat16), ((0, Bp - B), (0, in0_pad - in_dim)))

    kernel = _make_kernel(packed["layer_meta"])

    out = pl.pallas_call(
        kernel,
        out_shape=jax.ShapeDtypeStruct((Bp, out_pad), jnp.float32),
        grid_spec=pltpu.PrefetchScalarGridSpec(
            num_scalar_prefetch=0,
            grid=(Bp // TB,),
            in_specs=[
                pl.BlockSpec((TB, in0_pad), lambda i: (i, 0)),      # x: batch-tiled
                pl.BlockSpec(w_slab.shape, lambda i: (0, 0)),       # weights: resident
                pl.BlockSpec(b_slab.shape, lambda i: (0, 0)),       # biases: resident
            ],
            out_specs=pl.BlockSpec((TB, out_pad), lambda i: (i, 0)),
        ),
        compiler_params=pltpu.CompilerParams(
            dimension_semantics=("parallel",)),   # shard batch over v7x's 2 TCs
    )(xb, w_slab, b_slab)

    # Drop batch padding and the zero-padded lanes beyond num_tasks.
    return out[:B, :T]


# ---------------------------------------------------------------------------
# Synthetic init + pure-JAX reference
# ---------------------------------------------------------------------------
def init_params(key, input_size, hidden_sizes, specific_sizes, num_tasks):
    """Deterministic synthetic init (not a checkpoint load)."""
    def linear(key, fan_in, fan_out):
        kw, kb = jax.random.split(key)
        bound = 1.0 / jnp.sqrt(fan_in)
        w = jax.random.uniform(kw, (fan_in, fan_out), jnp.float32, -bound, bound)
        b = jax.random.uniform(kb, (1, fan_out), jnp.float32, -bound, bound)
        return w, b

    keys = jax.random.split(key, 16)
    ki = iter(keys)

    shared = []
    dims = [input_size] + list(hidden_sizes)
    for i in range(len(hidden_sizes)):
        shared.append(linear(next(ki), dims[i], dims[i + 1]))

    def stacked(key, fan_in, fan_out):
        ws, bs = [], []
        for k in jax.random.split(key, num_tasks):
            w, b = linear(k, fan_in, fan_out)
            ws.append(w)
            bs.append(b)
        return jnp.stack(ws), jnp.stack(bs)

    wt1, bt1 = stacked(next(ki), hidden_sizes[-1], specific_sizes[0])
    wt2, bt2 = stacked(next(ki), specific_sizes[0], specific_sizes[1])
    wf, bf = stacked(next(ki), specific_sizes[1], 1)

    return {
        "shared": shared,
        "wt1": wt1, "bt1": bt1,
        "wt2": wt2, "bt2": bt2,
        "wf": wf, "bf": bf,
    }


def reference_forward(x, params):
    """Pure-JAX f32 reference mirroring the PyTorch forward (eval mode)."""
    def leaky(v):
        return jnp.where(v >= 0, v, LEAKY_SLOPE * v)

    h = x
    for w, b in params["shared"]:
        h = leaky(h @ w + b)
    outs = []
    T = params["wt1"].shape[0]
    for t in range(T):
        t1 = jnp.maximum(h @ params["wt1"][t] + params["bt1"][t], 0.0)
        t2 = jnp.maximum(t1 @ params["wt2"][t] + params["bt2"][t], 0.0)
        outs.append(t2 @ params["wf"][t] + params["bf"][t])
    return outs


if __name__ == "__main__":
    # Module hyperparameters (small, consistent with MultiTaskSpec.__init__).
    input_size = 32
    hidden_sizes = [64, 32]
    specific_sizes = [32, 16]
    num_tasks = 3
    batch = 256          # batch_tile=128 -> grid=(2,), exercises the batch grid
    # nn.Dropout(p=dropout_rate) is identity in eval mode -> omitted from kernel.

    key = jax.random.PRNGKey(0)
    kx, kp = jax.random.split(key)
    x = jax.random.normal(kx, (batch, input_size), jnp.float32)
    params = init_params(kp, input_size, hidden_sizes, specific_sizes, num_tasks)
    packed = pack_params(params)

    out = multitask_spec_forward(x, packed, batch_tile=128)   # [batch, num_tasks]
    out = jax.block_until_ready(out)
    assert out.shape == (batch, num_tasks), out.shape

    # bf16 MXU operands => compare against f32 reference with relaxed tolerance.
    refs = reference_forward(x, params)
    for t, r in enumerate(refs):
        col = out[:, t:t + 1]                    # PyTorch-style [batch, 1] per task
        assert col.shape == (batch, 1), col.shape
        assert jnp.allclose(col, r, atol=5e-2, rtol=5e-2), (
            "mismatch vs reference", t, float(jnp.max(jnp.abs(col - r))))

    print("KERNEL_OK")
</pallas_src>

<mosaic_0001>
module attributes {stable_mosaic.version = 11 : i64} {
  func.func @kernel(%arg0: i32, %arg1: memref<128x128xbf16, #tpu.memory_space<vmem>>, %arg2: memref<128x640xbf16, #tpu.memory_space<vmem>>, %arg3: memref<1x640xf32, #tpu.memory_space<vmem>>, %arg4: memref<128x128xf32, #tpu.memory_space<vmem>>) attributes {dimension_semantics = [#tpu.dimension_semantics<parallel>], iteration_bounds = array<i64: 2>, scalar_prefetch = 0 : i64, scratch_operands = 0 : i64, tpu.core_type = #tpu.core_type<tc>, window_params = [{transform_indices = @transform_0, window_bounds = array<i64: 128, 128>}, {pipeline_mode = #tpu.pipeline_mode<synchronous>, transform_indices = @transform_1, window_bounds = array<i64: 128, 640>}, {pipeline_mode = #tpu.pipeline_mode<synchronous>, transform_indices = @transform_2, window_bounds = array<i64: 1, 640>}, {transform_indices = @transform_3, window_bounds = array<i64: 128, 128>}]} {
    %c0 = arith.constant 0 : index
    %c0_0 = arith.constant 0 : index
    %0 = vector.load %arg1[%c0, %c0_0] : memref<128x128xbf16, #tpu.memory_space<vmem>>, vector<128x128xbf16>
    %c0_1 = arith.constant 0 : index
    %c0_2 = arith.constant 0 : index
    %1 = vector.load %arg2[%c0_1, %c0_2] : memref<128x640xbf16, #tpu.memory_space<vmem>>, vector<128x128xbf16>
    %c0_3 = arith.constant 0 : index
    %c0_4 = arith.constant 0 : index
    %2 = vector.load %arg3[%c0_3, %c0_4] : memref<1x640xf32, #tpu.memory_space<vmem>>, vector<1x128xf32>
    %cst = arith.constant dense<0.000000e+00> : vector<128x128xf32>
    %3 = tpu.matmul %0, %1, %cst {dimension_numbers = #tpu.dot_dimension_numbers<[1], [0], [0], [1], [0, 0, 1, 1], [], []>} : vector<128x128xbf16>, vector<128x128xbf16>, vector<128x128xf32> -> vector<128x128xf32>
    %4 = vector.broadcast %2 : vector<1x128xf32> to vector<128x128xf32>
    %5 = arith.addf %3, %4 : vector<128x128xf32>
    %cst_5 = arith.constant 0.00999999977 : f32
    %6 = vector.broadcast %cst_5 : f32 to vector<128x128xf32>
    %7 = arith.mulf %6, %5 : vector<128x128xf32>
    %8 = arith.maximumf %5, %7 : vector<128x128xf32>
    %9 = arith.truncf %8 : vector<128x128xf32> to vector<128x128xbf16>
    %c0_6 = arith.constant 0 : index
    %c128 = arith.constant 128 : index
    %10 = vector.load %arg2[%c0_6, %c128] : memref<128x640xbf16, #tpu.memory_space<vmem>>, vector<128x128xbf16>
    %c0_7 = arith.constant 0 : index
    %c128_8 = arith.constant 128 : index
    %11 = vector.load %arg3[%c0_7, %c128_8] : memref<1x640xf32, #tpu.memory_space<vmem>>, vector<1x128xf32>
    %cst_9 = arith.constant dense<0.000000e+00> : vector<128x128xf32>
    %12 = tpu.matmul %9, %10, %cst_9 {dimension_numbers = #tpu.dot_dimension_numbers<[1], [0], [0], [1], [0, 0, 1, 1], [], []>} : vector<128x128xbf16>, vector<128x128xbf16>, vector<128x128xf32> -> vector<128x128xf32>
    %13 = vector.broadcast %11 : vector<1x128xf32> to vector<128x128xf32>
    %14 = arith.addf %12, %13 : vector<128x128xf32>
    %cst_10 = arith.constant 0.00999999977 : f32
    %15 = vector.broadcast %cst_10 : f32 to vector<128x128xf32>
    %16 = arith.mulf %15, %14 : vector<128x128xf32>
    %17 = arith.maximumf %14, %16 : vector<128x128xf32>
    %18 = arith.truncf %17 : vector<128x128xf32> to vector<128x128xbf16>
    %c0_11 = arith.constant 0 : index
    %c256 = arith.constant 256 : index
    %19 = vector.load %arg2[%c0_11, %c256] : memref<128x640xbf16, #tpu.memory_space<vmem>>, vector<128x128xbf16>
    %c0_12 = arith.constant 0 : index
    %c256_13 = arith.constant 256 : index
    %20 = vector.load %arg3[%c0_12, %c256_13] : memref<1x640xf32, #tpu.memory_space<vmem>>, vector<1x128xf32>
    %cst_14 = arith.constant dense<0.000000e+00> : vector<128x128xf32>
    %21 = tpu.matmul %18, %19, %cst_14 {dimension_numbers = #tpu.dot_dimension_numbers<[1], [0], [0], [1], [0, 0, 1, 1], [], []>} : vector<128x128xbf16>, vector<128x128xbf16>, vector<128x128xf32> -> vector<128x128xf32>
    %22 = vector.broadcast %20 : vector<1x128xf32> to vector<128x128xf32>
    %23 = arith.addf %21, %22 : vector<128x128xf32>
    %cst_15 = arith.constant 0.000000e+00 : f32
    %24 = vector.broadcast %cst_15 : f32 to vector<128x128xf32>
    %25 = arith.maximumf %23, %24 : vector<128x128xf32>
    %26 = arith.truncf %25 : vector<128x128xf32> to vector<128x128xbf16>
    %c0_16 = arith.constant 0 : index
    %c384 = arith.constant 384 : index
    %27 = vector.load %arg2[%c0_16, %c384] : memref<128x640xbf16, #tpu.memory_space<vmem>>, vector<128x128xbf16>
    %c0_17 = arith.constant 0 : index
    %c384_18 = arith.constant 384 : index
    %28 = vector.load %arg3[%c0_17, %c384_18] : memref<1x640xf32, #tpu.memory_space<vmem>>, vector<1x128xf32>
    %cst_19 = arith.constant dense<0.000000e+00> : vector<128x128xf32>
    %29 = tpu.matmul %26, %27, %cst_19 {dimension_numbers = #tpu.dot_dimension_numbers<[1], [0], [0], [1], [0, 0, 1, 1], [], []>} : vector<128x128xbf16>, vector<128x128xbf16>, vector<128x128xf32> -> vector<128x128xf32>
    %30 = vector.broadcast %28 : vector<1x128xf32> to vector<128x128xf32>
    %31 = arith.addf %29, %30 : vector<128x128xf32>
    %cst_20 = arith.constant 0.000000e+00 : f32
    %32 = vector.broadcast %cst_20 : f32 to vector<128x128xf32>
    %33 = arith.maximumf %31, %32 : vector<128x128xf32>
    %34 = arith.truncf %33 : vector<128x128xf32> to vector<128x128xbf16>
    %c0_21 = arith.constant 0 : index
    %c512 = arith.constant 512 : index
    %35 = vector.load %arg2[%c0_21, %c512] : memref<128x640xbf16, #tpu.memory_space<vmem>>, vector<128x128xbf16>
    %c0_22 = arith.constant 0 : index
    %c512_23 = arith.constant 512 : index
    %36 = vector.load %arg3[%c0_22, %c512_23] : memref<1x640xf32, #tpu.memory_space<vmem>>, vector<1x128xf32>
    %cst_24 = arith.constant dense<0.000000e+00> : vector<128x128xf32>
    %37 = tpu.matmul %34, %35, %cst_24 {dimension_numbers = #tpu.dot_dimension_numbers<[1], [0], [0], [1], [0, 0, 1, 1], [], []>} : vector<128x128xbf16>, vector<128x128xbf16>, vector<128x128xf32> -> vector<128x128xf32>
    %38 = vector.broadcast %36 : vector<1x128xf32> to vector<128x128xf32>
    %39 = arith.addf %37, %38 : vector<128x128xf32>
    %c0_25 = arith.constant 0 : index
    %c0_26 = arith.constant 0 : index
    %40 = vector.load %arg4[%c0_25, %c0_26] : memref<128x128xf32, #tpu.memory_space<vmem>>, vector<128x128xf32>
    tpu.vector_store %arg4[%c0_25, %c0_26], %39 {strides = array<i32>} : memref<128x128xf32, #tpu.memory_space<vmem>>, vector<128x128xf32>,
    return
  }
  func.func @transform_0(%arg0: i32) -> (i32, i32) {
    %c0_i32 = arith.constant 0 : i32
    %c0_i32_0 = arith.constant 0 : i32
    return %arg0, %c0_i32 : i32, i32
  }
  func.func @transform_1(%arg0: i32) -> (i32, i32) {
    %c0_i32 = arith.constant 0 : i32
    %c0_i32_0 = arith.constant 0 : i32
    %c0_i32_1 = arith.constant 0 : i32
    return %c0_i32, %c0_i32_0 : i32, i32
  }
  func.func @transform_2(%arg0: i32) -> (i32, i32) {
    %c0_i32 = arith.constant 0 : i32
    %c0_i32_0 = arith.constant 0 : i32
    %c0_i32_1 = arith.constant 0 : i32
    return %c0_i32, %c0_i32_0 : i32, i32
  }
  func.func @transform_3(%arg0: i32) -> (i32, i32) {
    %c0_i32 = arith.constant 0 : i32
    %c0_i32_0 = arith.constant 0 : i32
    return %arg0, %c0_i32 : i32, i32
  }
}

</mosaic_0001>

<llo_original>
// kernel: tpu_custom_call.1
$region0: #{tpu_custom_call.1}
  #allocation0 [shape = 'u32[]', space=smem, size = 0x4, offset = 0x4, fixed_abs, tag = 'smem constant byte address 0x4 - core index']
  #allocation1 [shape = 'u32[72,128]{1,0:T(1,128)}', space=vmem, size = 0x9000, scoped, tag = 'internal scratch']
  %s0 = inlined_call_operand.hbm [shape: bf16[256,128], index: 0, kind: input, shape index: {}]
  %s1 = inlined_call_operand.hbm [shape: bf16[128,640], index: 1, kind: input, shape index: {}]
  %s2 = inlined_call_operand.hbm [shape: f32[1,640], index: 2, kind: input, shape index: {}]
  %s3 = inlined_call_operand.hbm [shape: f32[256,128], index: 3, kind: output, shape index: {}]
  %s4 = sld [smem:[#allocation0]]
  $region57: #{tpu_custom_call.1} parent=0
    _
  %s6 = ssub.s32 1, %s4
  %s7 = scalar_select 0, %s6, %s4
  $region1: #{tpu_custom_call.1} parent=0
    #allocation2 [shape = 'u8[65536]{0}', space=vmem, size = 0x10000, scoped, tag = 'input window, operand 0']
    #allocation3 [shape = 's32[2]{0}', space=sflag, size = 0x8, scoped, tag = 'scoped memory for tpu_custom_call.1']
    #allocation4 [shape = 's32[2]{0}', space=sflag, size = 0x8, scoped, tag = 'scoped memory for tpu_custom_call.1']
    #allocation5 [shape = 'u8[163840]{0}', space=vmem, size = 0x28000, scoped, tag = 'input window, operand 1, single buffered']
    #allocation6 [shape = 's32[1]{0}', space=sflag, size = 0x4, scoped, tag = 'scoped memory for tpu_custom_call.1']
    #allocation7 [shape = 'u8[2560]{0}', space=vmem, size = 0xc00, scoped, tag = 'input window, operand 2, single buffered']
    #allocation8 [shape = 'u8[131072]{0}', space=vmem, size = 0x20000, scoped, tag = 'output window, operand 0']
    %8 = vsyncpa [#allocation3], 0
    %s9 = scalar_lea.sflag [#allocation3], 1
    %10 = vsyncpa %s9, 0
    %11 = vsyncpa [#allocation6], 0
    %12 = vsyncpa [#allocation4], 0
    %s13 = scalar_lea.sflag [#allocation4], 1
    %14 = vsyncpa %s13, 0
    loop: start=0, step=1, limit=4
    $region2: #{tpu_custom_call.1} parent=1 // loop_pre_header
      _
    $region3: #{tpu_custom_call.1} parent=1 // loop_header
      %s16 = sphi 0, %s20
      %p17 = scmp.ge.s32.totalorder %s16, 4
      %s26 = sphi 0, %s28
      %s29 = sphi 0, %s26
      %s30 = sphi 0, %s29
      %s46 = sphi 0, %s30
      %s50 = sphi 0, %s50
      %s52 = sphi 0, %s50
      %s53 = sphi 0, %s52
      %s67 = sphi 0, %s53
      %s71 = sphi 0, %s71
      %s73 = sphi 0, %s71
      %s74 = sphi 0, %s73
      %s88 = sphi 0, %s74
      %s94 = sphi 0, %s96
      %s97 = sphi 0, %s94
      %s98 = sphi 0, %s97
      %s114 = sphi 0, %s98
    $region4: #{tpu_custom_call.1} parent=1 // loop_header_branch
      %19 = sbr.rel (%p17) target = $region8
    $region5: #{tpu_custom_call.1} parent=1 // loop_body
      %s21 = ssub.s32 %s16, 1
      %s22 = ssub.s32 %s16, 2
      %s23 = sadd.s32 %s16, 1
      %s24 = ssub.s32 %s16, %s23
      %p25 = scmp.eq.s32.totalorder %s24, 0
      %s27 = sadd.s32 %s26, 1
      %s28 = scalar_select %p25, %s26, %s27
      %p31 = pneg %p25
      %p32 = scmp.eq.s32.totalorder %s16, 1
      %p33 = por %p31, %p32
      %p34 = scmp.ne.s32.totalorder %s26, %s29
      %p35 = scmp.eq.s32.totalorder %s16, 0
      %p36 = por %p34, %p35
      %p37 = scmp.ne.s32.totalorder %s26, %s29
      %p38 = scmp.eq.s32.totalorder %s21, 1
      %p39 = por %p37, %p38
      %p40 = scmp.ne.s32.totalorder %s29, %s30
      %p41 = scmp.eq.s32.totalorder %s21, 0
      %p42 = por %p40, %p41
      %p43 = scmp.ne.s32.totalorder %s29, %s30
      %p44 = scmp.eq.s32.totalorder %s22, 1
      %p45 = por %p43, %p44
      %p47 = scmp.ne.s32.totalorder %s30, %s46
      %p48 = scmp.eq.s32.totalorder %s22, 0
      %p49 = por %p47, %p48
      %s51 = sadd.s32 %s50, 1
      %p54 = scmp.eq.s32.totalorder %s16, 1
      %p55 = scmp.ne.s32.totalorder %s50, %s52
      %p56 = scmp.eq.s32.totalorder %s16, 0
      %p57 = por %p55, %p56
      %p58 = scmp.ne.s32.totalorder %s50, %s52
      %p59 = scmp.eq.s32.totalorder %s21, 1
      %p60 = por %p58, %p59
      %p61 = scmp.ne.s32.totalorder %s52, %s53
      %p62 = scmp.eq.s32.totalorder %s21, 0
      %p63 = por %p61, %p62
      %p64 = scmp.ne.s32.totalorder %s52, %s53
      %p65 = scmp.eq.s32.totalorder %s22, 1
      %p66 = por %p64, %p65
      %p68 = scmp.ne.s32.totalorder %s53, %s67
      %p69 = scmp.eq.s32.totalorder %s22, 0
      %p70 = por %p68, %p69
      %s72 = sadd.s32 %s71, 1
      %p75 = scmp.eq.s32.totalorder %s16, 1
      %p76 = scmp.ne.s32.totalorder %s71, %s73
      %p77 = scmp.eq.s32.totalorder %s16, 0
      %p78 = por %p76, %p77
      %p79 = scmp.ne.s32.totalorder %s71, %s73
      %p80 = scmp.eq.s32.totalorder %s21, 1
      %p81 = por %p79, %p80
      %p82 = scmp.ne.s32.totalorder %s73, %s74
      %p83 = scmp.eq.s32.totalorder %s21, 0
      %p84 = por %p82, %p83
      %p85 = scmp.ne.s32.totalorder %s73, %s74
      %p86 = scmp.eq.s32.totalorder %s22, 1
      %p87 = por %p85, %p86
      %p89 = scmp.ne.s32.totalorder %s74, %s88
      %p90 = scmp.eq.s32.totalorder %s22, 0
      %p91 = por %p89, %p90
      %s92 = ssub.s32 %s16, %s23
      %p93 = scmp.eq.s32.totalorder %s92, 0
      %s95 = sadd.s32 %s94, 1
      %s96 = scalar_select %p93, %s94, %s95
      %p99 = pneg %p93
      %p100 = scmp.eq.s32.totalorder %s16, 1
      %p101 = por %p99, %p100
      %p102 = scmp.ne.s32.totalorder %s94, %s97
      %p103 = scmp.eq.s32.totalorder %s16, 0
      %p104 = por %p102, %p103
      %p105 = scmp.ne.s32.totalorder %s94, %s97
      %p106 = scmp.eq.s32.totalorder %s21, 1
      %p107 = por %p105, %p106
      %p108 = scmp.ne.s32.totalorder %s97, %s98
      %p109 = scmp.eq.s32.totalorder %s21, 0
      %p110 = por %p108, %p109
      %p111 = scmp.ne.s32.totalorder %s97, %s98
      %p112 = scmp.eq.s32.totalorder %s22, 1
      %p113 = por %p111, %p112
      %p115 = scmp.ne.s32.totalorder %s98, %s114
      %p116 = scmp.eq.s32.totalorder %s22, 0
      %p117 = por %p115, %p116
      %p118 = scmp.le.s32.totalorder 1, %s16
      %p119 = scmp.lt.s32.totalorder %s16, 3
      %p120 = pnand %p118, %p119
      %p121 = pneg %p120
      // Predicated region
      $region9: #{tpu_custom_call.1} parent=5 // pred_check
        _
      $region10: #{tpu_custom_call.1} parent=5 // pred_check_branch
        %123 = sbr.rel (%p120) target = $region12
      $region11: #{tpu_custom_call.1} parent=5 // pred_region
        %s124 = ssub.s32 %s16, 1
        // Predicated region
        $region13: #{tpu_custom_call.1} parent=11 // pred_check
          %p125 = pneg %p63
        $region14: #{tpu_custom_call.1} parent=11 // pred_check_branch
          %127 = sbr.rel (%p125) target = $region16
        $region15: #{tpu_custom_call.1} parent=11 // pred_region
          %129 = vsyncadd [#allocation6], 0
          %s130 = sshll.u32 %s1, 4
          %s131 = int_to_ptr.hbm [resolvable:$true] %s130
          %s132 = sshll.u32 [#allocation5], 4
          %s133 = int_to_ptr.vmem [resolvable:$true] %s132
          %138 = dma.hbm_to_vmem [thread:$0]  %s131, 5120, %s133, [#allocation6], 320, 320, 20
        $region16: #{tpu_custom_call.1} parent=11 // pred_fallthru
          _
        // Predicated region
        $region17: #{tpu_custom_call.1} parent=11 // pred_check
          %p139 = pneg %p84
        $region18: #{tpu_custom_call.1} parent=11 // pred_check_branch
          %141 = sbr.rel (%p139) target = $region20
        $region19: #{tpu_custom_call.1} parent=11 // pred_region
          %143 = vsyncadd [#allocation6], 0
          %s145 = sshll.u32 %s2, 4
          %s146 = int_to_ptr.hbm [resolvable:$true] %s145
          %s147 = sshll.u32 [#allocation7], 4
          %s148 = int_to_ptr.vmem [resolvable:$true] %s147
          %150 = dma.hbm_to_vmem [thread:$0]  %s146, 80, %s148, [#allocation6]
        $region20: #{tpu_custom_call.1} parent=11 // pred_fallthru
          _
      $region12: #{tpu_custom_call.1} parent=5 // pred_fallthru
        _
      %p151 = scmp.lt.s32.totalorder %s16, 2
      // Predicated region
      $region21: #{tpu_custom_call.1} parent=5 // pred_check
        %p152 = pneg %p151
      $region22: #{tpu_custom_call.1} parent=5 // pred_check_branch
        %154 = sbr.rel (%p152) target = $region24
      $region23: #{tpu_custom_call.1} parent=5 // pred_region
        // Predicated region
        $region25: #{tpu_custom_call.1} parent=23 // pred_check
          %p155 = pneg %p36
        $region26: #{tpu_custom_call.1} parent=23 // pred_check_branch
          %157 = sbr.rel (%p155) target = $region28
        $region27: #{tpu_custom_call.1} parent=23 // pred_region
          %s158 = sand.u32 %s26, 1
          %s159 = scalar_lea.sflag [#allocation3], %s158
          %s160 = sand.u32 %s26, 1
          %s161 = smul.addr %s160, 64
          %s162 = scalar_lea.vmem [#allocation2], %s161
          %s163 = smul.u32 16, %s16
          %165 = vsyncadd %s159, 0
          %s166 = smul.addr %s163, 4
          %s167 = scalar_lea.hbm %s0, %s166
          %s168 = sshll.u32 %s167, 4
          %s169 = int_to_ptr.hbm [resolvable:$true] %s168
          %s170 = sshll.u32 %s162, 4
          %s171 = int_to_ptr.vmem [resolvable:$true] %s170
          %176 = dma.hbm_to_vmem [thread:$0]  %s169, 1024, %s171, %s159, 64, 64, 4
        $region28: #{tpu_custom_call.1} parent=23 // pred_fallthru
          _
      $region24: #{tpu_custom_call.1} parent=5 // pred_fallthru
        _
      %p177 = scmp.le.s32.totalorder 1, %s16
      %p178 = scmp.lt.s32.totalorder %s16, 3
      %p179 = pnand %p177, %p178
      %p180 = pneg %p179
      // Predicated region
      $region29: #{tpu_custom_call.1} parent=5 // pred_check
        _
      $region30: #{tpu_custom_call.1} parent=5 // pred_check_branch
        %182 = sbr.rel (%p179) target = $region32
      $region31: #{tpu_custom_call.1} parent=5 // pred_region
        %s183 = ssub.s32 %s16, 1
        %s184 = sand.u32 %s29, 1
        %s185 = scalar_lea.sflag [#allocation3], %s184
        %s186 = sand.u32 %s29, 1
        %s187 = smul.addr %s186, 64
        %s188 = scalar_lea.vmem [#allocation2], %s187
        // Predicated region
        $region33: #{tpu_custom_call.1} parent=31 // pred_check
          %p189 = pneg %p42
        $region34: #{tpu_custom_call.1} parent=31 // pred_check_branch
          %191 = sbr.rel (%p189) target = $region36
        $region35: #{tpu_custom_call.1} parent=31 // pred_region
          %193 = dma.done %s185, 1024
        $region36: #{tpu_custom_call.1} parent=31 // pred_fallthru
          _
        // Predicated region
        $region37: #{tpu_custom_call.1} parent=31 // pred_check
          %p194 = pneg %p63
        $region38: #{tpu_custom_call.1} parent=31 // pred_check_branch
          %196 = sbr.rel (%p194) target = $region40
        $region39: #{tpu_custom_call.1} parent=31 // pred_region
          %198 = dma.done [#allocation6], 5120
        $region40: #{tpu_custom_call.1} parent=31 // pred_fallthru
          _
        // Predicated region
        $region41: #{tpu_custom_call.1} parent=31 // pred_check
          %p199 = pneg %p84
        $region42: #{tpu_custom_call.1} parent=31 // pred_check_branch
          %201 = sbr.rel (%p199) target = $region44
        $region43: #{tpu_custom_call.1} parent=31 // pred_region
          %203 = dma.done [#allocation6], 80
        $region44: #{tpu_custom_call.1} parent=31 // pred_fallthru
          _
        %s204 = sand.u32 %s29, 1
        %s205 = scalar_lea.sflag [#allocation3], %s204
        %s206 = sand.u32 %s29, 1
        %s207 = smul.addr %s206, 64
        %s208 = scalar_lea.vmem [#allocation2], %s207
        %p209 = pneg %p42
        %p210 = pneg %p39
        %p211 = pneg %p63
        %p212 = pneg %p60
        %p213 = pneg %p84
        %p214 = pneg %p81
        %p215 = pneg %p110
        %p216 = pneg %p107
        %s217 = sand.u32 %s97, 1
        %s218 = scalar_lea.sflag [#allocation4], %s217
        %s219 = sand.u32 %s97, 1
        %s220 = smul.addr %s219, 128
        %s221 = scalar_lea.vmem [#allocation8], %s220
        %s222 = smul.u32 16, %s21
        %s223 = smul.u32 16, %s21
        %v224 = vld [vmem:[%s188] sm:$0xf]
        %v225 = vld [vmem:[%s188 + $0x4] sm:$0xf]
        %v226 = vld [vmem:[%s188 + $0x8] sm:$0xf]
        %v227 = vld [vmem:[%s188 + $0xc] sm:$0xf]
        %v228 = vld [vmem:[%s188 + $0x10] sm:$0xf]
        %v229 = vld [vmem:[%s188 + $0x14] sm:$0xf]
        %v230 = vld [vmem:[%s188 + $0x18] sm:$0xf]
        %v231 = vld [vmem:[%s188 + $0x1c] sm:$0xf]
        %v232 = vld [vmem:[%s188 + $0x20] sm:$0xf]
        %v233 = vld [vmem:[%s188 + $0x24] sm:$0xf]
        %v234 = vld [vmem:[%s188 + $0x28] sm:$0xf]
        %v235 = vld [vmem:[%s188 + $0x2c] sm:$0xf]
        %v236 = vld [vmem:[%s188 + $0x30] sm:$0xf]
        %v237 = vld [vmem:[%s188 + $0x34] sm:$0xf]
        %v238 = vld [vmem:[%s188 + $0x38] sm:$0xf]
        %v239 = vld [vmem:[%s188 + $0x3c] sm:$0xf]
        %v240 = vld [vmem:[#allocation5] sm:$0xf]
        %v241 = vld [vmem:[#allocation5 + $0x14] sm:$0xf]
        %v242 = vld [vmem:[#allocation5 + $0x28] sm:$0xf]
        %v243 = vld [vmem:[#allocation5 + $0x3c] sm:$0xf]
        %v244 = vld [vmem:[#allocation5 + $0x50] sm:$0xf]
        %v245 = vld [vmem:[#allocation5 + $0x64] sm:$0xf]
        %v246 = vld [vmem:[#allocation5 + $0x78] sm:$0xf]
        %v247 = vld [vmem:[#allocation5 + $0x8c] sm:$0xf]
        %v248 = vld [vmem:[#allocation5 + $0xa0] sm:$0xf]
        %v249 = vld [vmem:[#allocation5 + $0xb4] sm:$0xf]
        %v250 = vld [vmem:[#allocation5 + $0xc8] sm:$0xf]
        %v251 = vld [vmem:[#allocation5 + $0xdc] sm:$0xf]
        %v252 = vld [vmem:[#allocation5 + $0xf0] sm:$0xf]
        %v253 = vld [vmem:[#allocation5 + $0x104] sm:$0xf]
        %v254 = vld [vmem:[#allocation5 + $0x118] sm:$0xf]
        %v255 = vld [vmem:[#allocation5 + $0x12c] sm:$0xf]
        %v256 = vld [vmem:[#allocation7] sm:$0x1]
        %v258 = vperm.slane %v256, 0
        %v276 = vunpack.c.l.b16 %v224
        %v277 = vunpack.c.l.b16 %v225
        %v278 = vunpack.c.l.b16 %v226
        %v279 = vunpack.c.l.b16 %v227
        %v280 = vunpack.c.l.b16 %v228
        %v281 = vunpack.c.l.b16 %v229
        %v282 = vunpack.c.l.b16 %v230
        %v283 = vunpack.c.l.b16 %v231
        %v284 = vunpack.c.l.b16 %v232
        %v285 = vunpack.c.l.b16 %v233
        %v286 = vunpack.c.l.b16 %v234
        %v287 = vunpack.c.l.b16 %v235
        %v288 = vunpack.c.l.b16 %v236
        %v289 = vunpack.c.l.b16 %v237
        %v290 = vunpack.c.l.b16 %v238
        %v291 = vunpack.c.l.b16 %v239
        %v292 = vpack.c.b16 %v277, %v276
        %v293 = vpack.c.b16 %v279, %v278
        %v294 = vpack.c.b16 %v281, %v280
        %v295 = vpack.c.b16 %v283, %v282
        %v296 = vpack.c.b16 %v285, %v284
        %v297 = vpack.c.b16 %v287, %v286
        %v298 = vpack.c.b16 %v289, %v288
        %v299 = vpack.c.b16 %v291, %v290
        %v324 = vunpack.c.l.b16 %v240
        %v325 = vunpack.c.l.b16 %v241
        %v326 = vunpack.c.l.b16 %v242
        %v327 = vunpack.c.l.b16 %v243
        %v328 = vunpack.c.l.b16 %v244
        %v329 = vunpack.c.l.b16 %v245
        %v330 = vunpack.c.l.b16 %v246
        %v331 = vunpack.c.l.b16 %v247
        %v332 = vunpack.c.l.b16 %v248
        %v333 = vunpack.c.l.b16 %v249
        %v334 = vunpack.c.l.b16 %v250
        %v335 = vunpack.c.l.b16 %v251
        %v336 = vunpack.c.l.b16 %v252
        %v337 = vunpack.c.l.b16 %v253
        %v338 = vunpack.c.l.b16 %v254
        %v339 = vunpack.c.l.b16 %v255
        %v340 = vpack.c.b16 %v325, %v324
        %v341 = vpack.c.b16 %v327, %v326
        %v342 = vpack.c.b16 %v329, %v328
        %v343 = vpack.c.b16 %v331, %v330
        %v344 = vpack.c.b16 %v333, %v332
        %v345 = vpack.c.b16 %v335, %v334
        %v346 = vpack.c.b16 %v337, %v336
        %v347 = vpack.c.b16 %v339, %v338
        %356 = vmatpush.bf16.msra.mxu0 %v347
        %357 = vmatpush.bf16.msra.mxu0 %v346
        %358 = vmatpush.bf16.msra.mxu0 %v345
        %359 = vmatpush.bf16.msra.mxu0 %v344
        %360 = vmatpush.bf16.msra.mxu0 %v343
        %361 = vmatpush.bf16.msra.mxu0 %v342
        %362 = vmatpush.bf16.msra.mxu0 %v341
        %363 = vmatpush.bf16.msra.mxu0 %v340
        %364 = vmatmul.bf16.gmra.mxu0 %v292
        %v365 = vpop.f32.mrf.mxu0
        %v366 = vadd.f32 %v258, %v365
        %v367 = vpop.f32.mrf.mxu0
        %v368 = vadd.f32 %v258, %v367
        %369 = vmatmul.bf16.gmra.mxu0 %v293
        %v370 = vpop.f32.mrf.mxu0
        %v371 = vadd.f32 %v258, %v370
        %v372 = vpop.f32.mrf.mxu0
        %v373 = vadd.f32 %v258, %v372
        %374 = vmatmul.bf16.gmra.mxu0 %v294
        %v375 = vpop.f32.mrf.mxu0
        %v376 = vadd.f32 %v258, %v375
        %v377 = vpop.f32.mrf.mxu0
        %v378 = vadd.f32 %v258, %v377
        %379 = vmatmul.bf16.gmra.mxu0 %v295
        %v380 = vpop.f32.mrf.mxu0
        %v381 = vadd.f32 %v258, %v380
        %v382 = vpop.f32.mrf.mxu0
        %v383 = vadd.f32 %v258, %v382
        %384 = vmatmul.bf16.gmra.mxu0 %v296
        %v385 = vpop.f32.mrf.mxu0
        %v386 = vadd.f32 %v258, %v385
        %v387 = vpop.f32.mrf.mxu0
        %v388 = vadd.f32 %v258, %v387
        %389 = vmatmul.bf16.gmra.mxu0 %v297
        %v390 = vpop.f32.mrf.mxu0
        %v391 = vadd.f32 %v258, %v390
        %v392 = vpop.f32.mrf.mxu0
        %v393 = vadd.f32 %v258, %v392
        %394 = vmatmul.bf16.gmra.mxu0 %v298
        %v395 = vpop.f32.mrf.mxu0
        %v396 = vadd.f32 %v258, %v395
        %v397 = vpop.f32.mrf.mxu0
        %v398 = vadd.f32 %v258, %v397
        %399 = vmatmul.bf16.gmra.mxu0 %v299
        %v400 = vpop.f32.mrf.mxu0
        %v401 = vadd.f32 %v258, %v400
        %v402 = vpop.f32.mrf.mxu0
        %v403 = vadd.f32 %v258, %v402
        %404 = vdwg.mxu0
        %v405 = vmul.f32 %v366, 0.01
        %v406 = vmul.f32 %v368, 0.01
        %v407 = vmul.f32 %v371, 0.01
        %v408 = vmul.f32 %v373, 0.01
        %v409 = vmul.f32 %v376, 0.01
        %v410 = vmul.f32 %v378, 0.01
        %v411 = vmul.f32 %v381, 0.01
        %v412 = vmul.f32 %v383, 0.01
        %v413 = vmul.f32 %v386, 0.01
        %v414 = vmul.f32 %v388, 0.01
        %v415 = vmul.f32 %v391, 0.01
        %v416 = vmul.f32 %v393, 0.01
        %v417 = vmul.f32 %v396, 0.01
        %v418 = vmul.f32 %v398, 0.01
        %v419 = vmul.f32 %v401, 0.01
        %v420 = vmul.f32 %v403, 0.01
        %v421 = vmax.f32 %v366, %v405
        %v422 = vmax.f32 %v368, %v406
        %v423 = vmax.f32 %v371, %v407
        %v424 = vmax.f32 %v373, %v408
        %v425 = vmax.f32 %v376, %v409
        %v426 = vmax.f32 %v378, %v410
        %v427 = vmax.f32 %v381, %v411
        %v428 = vmax.f32 %v383, %v412
        %v429 = vmax.f32 %v386, %v413
        %v430 = vmax.f32 %v388, %v414
        %v431 = vmax.f32 %v391, %v415
        %v432 = vmax.f32 %v393, %v416
        %v433 = vmax.f32 %v396, %v417
        %v434 = vmax.f32 %v398, %v418
        %v435 = vmax.f32 %v401, %v419
        %v436 = vmax.f32 %v403, %v420
        %v437 = vpack.c.bf16 %v422, %v421
        %v438 = vpack.c.bf16 %v424, %v423
        %v439 = vpack.c.bf16 %v426, %v425
        %v440 = vpack.c.bf16 %v428, %v427
        %v441 = vpack.c.bf16 %v430, %v429
        %v442 = vpack.c.bf16 %v432, %v431
        %v443 = vpack.c.bf16 %v434, %v433
        %v444 = vpack.c.bf16 %v436, %v435
        %v445 = vld [vmem:[#allocation5 + $0x4] sm:$0xf]
        %v446 = vld [vmem:[#allocation5 + $0x18] sm:$0xf]
        %v447 = vld [vmem:[#allocation5 + $0x2c] sm:$0xf]
        %v448 = vld [vmem:[#allocation5 + $0x40] sm:$0xf]
        %v449 = vld [vmem:[#allocation5 + $0x54] sm:$0xf]
        %v450 = vld [vmem:[#allocation5 + $0x68] sm:$0xf]
        %v451 = vld [vmem:[#allocation5 + $0x7c] sm:$0xf]
        %v452 = vld [vmem:[#allocation5 + $0x90] sm:$0xf]
        %v453 = vld [vmem:[#allocation5 + $0xa4] sm:$0xf]
        %v454 = vld [vmem:[#allocation5 + $0xb8] sm:$0xf]
        %v455 = vld [vmem:[#allocation5 + $0xcc] sm:$0xf]
        %v456 = vld [vmem:[#allocation5 + $0xe0] sm:$0xf]
        %v457 = vld [vmem:[#allocation5 + $0xf4] sm:$0xf]
        %v458 = vld [vmem:[#allocation5 + $0x108] sm:$0xf]
        %v459 = vld [vmem:[#allocation5 + $0x11c] sm:$0xf]
        %v460 = vld [vmem:[#allocation5 + $0x130] sm:$0xf]
        %v461 = vld [vmem:[#allocation7 + $0x1] sm:$0x1]
        %v463 = vperm.slane %v461, 0
        %v481 = vunpack.c.l.b16 %v445
        %v482 = vunpack.c.l.b16 %v446
        %v483 = vunpack.c.l.b16 %v447
        %v484 = vunpack.c.l.b16 %v448
        %v485 = vunpack.c.l.b16 %v449
        %v486 = vunpack.c.l.b16 %v450
        %v487 = vunpack.c.l.b16 %v451
        %v488 = vunpack.c.l.b16 %v452
        %v489 = vunpack.c.l.b16 %v453
        %v490 = vunpack.c.l.b16 %v454
        %v491 = vunpack.c.l.b16 %v455
        %v492 = vunpack.c.l.b16 %v456
        %v493 = vunpack.c.l.b16 %v457
        %v494 = vunpack.c.l.b16 %v458
        %v495 = vunpack.c.l.b16 %v459
        %v496 = vunpack.c.l.b16 %v460
        %v497 = vpack.c.b16 %v482, %v481
        %v498 = vpack.c.b16 %v484, %v483
        %v499 = vpack.c.b16 %v486, %v485
        %v500 = vpack.c.b16 %v488, %v487
        %v501 = vpack.c.b16 %v490, %v489
        %v502 = vpack.c.b16 %v492, %v491
        %v503 = vpack.c.b16 %v494, %v493
        %v504 = vpack.c.b16 %v496, %v495
        %513 = vmatpush.bf16.msra.mxu0 %v504
        %514 = vmatpush.bf16.msra.mxu0 %v503
        %515 = vmatpush.bf16.msra.mxu0 %v502
        %516 = vmatpush.bf16.msra.mxu0 %v501
        %517 = vmatpush.bf16.msra.mxu0 %v500
        %518 = vmatpush.bf16.msra.mxu0 %v499
        %519 = vmatpush.bf16.msra.mxu0 %v498
        %520 = vmatpush.bf16.msra.mxu0 %v497
        %521 = vmatmul.bf16.gmra.mxu0 %v437
        %v522 = vpop.f32.mrf.mxu0
        %v523 = vadd.f32 %v463, %v522
        %v524 = vpop.f32.mrf.mxu0
        %v525 = vadd.f32 %v463, %v524
        %526 = vmatmul.bf16.gmra.mxu0 %v438
        %v527 = vpop.f32.mrf.mxu0
        %v528 = vadd.f32 %v463, %v527
        %v529 = vpop.f32.mrf.mxu0
        %v530 = vadd.f32 %v463, %v529
        %531 = vmatmul.bf16.gmra.mxu0 %v439
        %v532 = vpop.f32.mrf.mxu0
        %v533 = vadd.f32 %v463, %v532
        %v534 = vpop.f32.mrf.mxu0
        %v535 = vadd.f32 %v463, %v534
        %536 = vmatmul.bf16.gmra.mxu0 %v440
        %v537 = vpop.f32.mrf.mxu0
        %v538 = vadd.f32 %v463, %v537
        %v539 = vpop.f32.mrf.mxu0
        %v540 = vadd.f32 %v463, %v539
        %541 = vmatmul.bf16.gmra.mxu0 %v441
        %v542 = vpop.f32.mrf.mxu0
        %v543 = vadd.f32 %v463, %v542
        %v544 = vpop.f32.mrf.mxu0
        %v545 = vadd.f32 %v463, %v544
        %546 = vmatmul.bf16.gmra.mxu0 %v442
        %v547 = vpop.f32.mrf.mxu0
        %v548 = vadd.f32 %v463, %v547
        %v549 = vpop.f32.mrf.mxu0
        %v550 = vadd.f32 %v463, %v549
        %551 = vmatmul.bf16.gmra.mxu0 %v443
        %v552 = vpop.f32.mrf.mxu0
        %v553 = vadd.f32 %v463, %v552
        %v554 = vpop.f32.mrf.mxu0
        %v555 = vadd.f32 %v463, %v554
        %556 = vmatmul.bf16.gmra.mxu0 %v444
        %v557 = vpop.f32.mrf.mxu0
        %v558 = vadd.f32 %v463, %v557
        %v559 = vpop.f32.mrf.mxu0
        %v560 = vadd.f32 %v463, %v559
        %561 = vdwg.mxu0
        %v562 = vmul.f32 %v523, 0.01
        %v563 = vmul.f32 %v525, 0.01
        %v564 = vmul.f32 %v528, 0.01
        %v565 = vmul.f32 %v530, 0.01
        %v566 = vmul.f32 %v533, 0.01
        %v567 = vmul.f32 %v535, 0.01
        %v568 = vmul.f32 %v538, 0.01
        %v569 = vmul.f32 %v540, 0.01
        %v570 = vmul.f32 %v543, 0.01
        %v571 = vmul.f32 %v545, 0.01
        %v572 = vmul.f32 %v548, 0.01
        %v573 = vmul.f32 %v550, 0.01
        %v574 = vmul.f32 %v553, 0.01
        %v575 = vmul.f32 %v555, 0.01
        %v576 = vmul.f32 %v558, 0.01
        %v577 = vmul.f32 %v560, 0.01
        %v578 = vmax.f32 %v523, %v562
        %v579 = vmax.f32 %v525, %v563
        %v580 = vmax.f32 %v528, %v564
        %v581 = vmax.f32 %v530, %v565
        %v582 = vmax.f32 %v533, %v566
        %v583 = vmax.f32 %v535, %v567
        %v584 = vmax.f32 %v538, %v568
        %v585 = vmax.f32 %v540, %v569
        %v586 = vmax.f32 %v543, %v570
        %v587 = vmax.f32 %v545, %v571
        %v588 = vmax.f32 %v548, %v572
        %v589 = vmax.f32 %v550, %v573
        %v590 = vmax.f32 %v553, %v574
        %v591 = vmax.f32 %v555, %v575
        %v592 = vmax.f32 %v558, %v576
        %v593 = vmax.f32 %v560, %v577
        %v594 = vpack.c.bf16 %v579, %v578
        %v595 = vpack.c.bf16 %v581, %v580
        %v596 = vpack.c.bf16 %v583, %v582
        %v597 = vpack.c.bf16 %v585, %v584
        %v598 = vpack.c.bf16 %v587, %v586
        %v599 = vpack.c.bf16 %v589, %v588
        %v600 = vpack.c.bf16 %v591, %v590
        %v601 = vpack.c.bf16 %v593, %v592
        %v602 = vld [vmem:[#allocation5 + $0x8] sm:$0xf]
        %v603 = vld [vmem:[#allocation5 + $0x1c] sm:$0xf]
        %v604 = vld [vmem:[#allocation5 + $0x30] sm:$0xf]
        %v605 = vld [vmem:[#allocation5 + $0x44] sm:$0xf]
        %v606 = vld [vmem:[#allocation5 + $0x58] sm:$0xf]
        %v607 = vld [vmem:[#allocation5 + $0x6c] sm:$0xf]
        %v608 = vld [vmem:[#allocation5 + $0x80] sm:$0xf]
        %v609 = vld [vmem:[#allocation5 + $0x94] sm:$0xf]
        %v610 = vld [vmem:[#allocation5 + $0xa8] sm:$0xf]
        %v611 = vld [vmem:[#allocation5 + $0xbc] sm:$0xf]
        %v612 = vld [vmem:[#allocation5 + $0xd0] sm:$0xf]
        %v613 = vld [vmem:[#allocation5 + $0xe4] sm:$0xf]
        %v614 = vld [vmem:[#allocation5 + $0xf8] sm:$0xf]
        %v615 = vld [vmem:[#allocation5 + $0x10c] sm:$0xf]
        %v616 = vld [vmem:[#allocation5 + $0x120] sm:$0xf]
        %v617 = vld [vmem:[#allocation5 + $0x134] sm:$0xf]
        %v618 = vld [vmem:[#allocation7 + $0x2] sm:$0x1]
        %v620 = vperm.slane %v618, 0
        %v638 = vunpack.c.l.b16 %v602
        %v639 = vunpack.c.l.b16 %v603
        %v640 = vunpack.c.l.b16 %v604
        %v641 = vunpack.c.l.b16 %v605
        %v642 = vunpack.c.l.b16 %v606
        %v643 = vunpack.c.l.b16 %v607
        %v644 = vunpack.c.l.b16 %v608
        %v645 = vunpack.c.l.b16 %v609
        %v646 = vunpack.c.l.b16 %v610
        %v647 = vunpack.c.l.b16 %v611
        %v648 = vunpack.c.l.b16 %v612
        %v649 = vunpack.c.l.b16 %v613
        %v650 = vunpack.c.l.b16 %v614
        %v651 = vunpack.c.l.b16 %v615
        %v652 = vunpack.c.l.b16 %v616
        %v653 = vunpack.c.l.b16 %v617
        %v654 = vpack.c.b16 %v639, %v638
        %v655 = vpack.c.b16 %v641, %v640
        %v656 = vpack.c.b16 %v643, %v642
        %v657 = vpack.c.b16 %v645, %v644
        %v658 = vpack.c.b16 %v647, %v646
        %v659 = vpack.c.b16 %v649, %v648
        %v660 = vpack.c.b16 %v651, %v650
        %v661 = vpack.c.b16 %v653, %v652
        %670 = vmatpush.bf16.msra.mxu0 %v661
        %671 = vmatpush.bf16.msra.mxu0 %v660
        %672 = vmatpush.bf16.msra.mxu0 %v659
        %673 = vmatpush.bf16.msra.mxu0 %v658
        %674 = vmatpush.bf16.msra.mxu0 %v657
        %675 = vmatpush.bf16.msra.mxu0 %v656
        %676 = vmatpush.bf16.msra.mxu0 %v655
        %677 = vmatpush.bf16.msra.mxu0 %v654
        %678 = vmatmul.bf16.gmra.mxu0 %v594
        %v679 = vpop.f32.mrf.mxu0
        %v680 = vadd.f32 %v620, %v679
        %v681 = vpop.f32.mrf.mxu0
        %v682 = vadd.f32 %v620, %v681
        %683 = vmatmul.bf16.gmra.mxu0 %v595
        %v684 = vpop.f32.mrf.mxu0
        %v685 = vadd.f32 %v620, %v684
        %v686 = vpop.f32.mrf.mxu0
        %v687 = vadd.f32 %v620, %v686
        %688 = vmatmul.bf16.gmra.mxu0 %v596
        %v689 = vpop.f32.mrf.mxu0
        %v690 = vadd.f32 %v620, %v689
        %v691 = vpop.f32.mrf.mxu0
        %v692 = vadd.f32 %v620, %v691
        %693 = vmatmul.bf16.gmra.mxu0 %v597
        %v694 = vpop.f32.mrf.mxu0
        %v695 = vadd.f32 %v620, %v694
        %v696 = vpop.f32.mrf.mxu0
        %v697 = vadd.f32 %v620, %v696
        %698 = vmatmul.bf16.gmra.mxu0 %v598
        %v699 = vpop.f32.mrf.mxu0
        %v700 = vadd.f32 %v620, %v699
        %v701 = vpop.f32.mrf.mxu0
        %v702 = vadd.f32 %v620, %v701
        %703 = vmatmul.bf16.gmra.mxu0 %v599
        %v704 = vpop.f32.mrf.mxu0
        %v705 = vadd.f32 %v620, %v704
        %v706 = vpop.f32.mrf.mxu0
        %v707 = vadd.f32 %v620, %v706
        %708 = vmatmul.bf16.gmra.mxu0 %v600
        %v709 = vpop.f32.mrf.mxu0
        %v710 = vadd.f32 %v620, %v709
        %v711 = vpop.f32.mrf.mxu0
        %v712 = vadd.f32 %v620, %v711
        %713 = vmatmul.bf16.gmra.mxu0 %v601
        %v714 = vpop.f32.mrf.mxu0
        %v715 = vadd.f32 %v620, %v714
        %v716 = vpop.f32.mrf.mxu0
        %v717 = vadd.f32 %v620, %v716
        %718 = vdwg.mxu0
        %v719 = vmax.f32 %v680, 0.0
        %v720 = vmax.f32 %v682, 0.0
        %v721 = vmax.f32 %v685, 0.0
        %v722 = vmax.f32 %v687, 0.0
        %v723 = vmax.f32 %v690, 0.0
        %v724 = vmax.f32 %v692, 0.0
        %v725 = vmax.f32 %v695, 0.0
        %v726 = vmax.f32 %v697, 0.0
        %v727 = vmax.f32 %v700, 0.0
        %v728 = vmax.f32 %v702, 0.0
        %v729 = vmax.f32 %v705, 0.0
        %v730 = vmax.f32 %v707, 0.0
        %v731 = vmax.f32 %v710, 0.0
        %v732 = vmax.f32 %v712, 0.0
        %v733 = vmax.f32 %v715, 0.0
        %v734 = vmax.f32 %v717, 0.0
        %v735 = vpack.c.bf16 %v720, %v719
        %v736 = vpack.c.bf16 %v722, %v721
        %v737 = vpack.c.bf16 %v724, %v723
        %v738 = vpack.c.bf16 %v726, %v725
        %v739 = vpack.c.bf16 %v728, %v727
        %v740 = vpack.c.bf16 %v730, %v729
        %v741 = vpack.c.bf16 %v732, %v731
        %v742 = vpack.c.bf16 %v734, %v733
        %v743 = vld [vmem:[#allocation5 + $0xc] sm:$0xf]
        %v744 = vld [vmem:[#allocation5 + $0x20] sm:$0xf]
        %v745 = vld [vmem:[#allocation5 + $0x34] sm:$0xf]
        %v746 = vld [vmem:[#allocation5 + $0x48] sm:$0xf]
        %v747 = vld [vmem:[#allocation5 + $0x5c] sm:$0xf]
        %v748 = vld [vmem:[#allocation5 + $0x70] sm:$0xf]
        %v749 = vld [vmem:[#allocation5 + $0x84] sm:$0xf]
        %v750 = vld [vmem:[#allocation5 + $0x98] sm:$0xf]
        %v751 = vld [vmem:[#allocation5 + $0xac] sm:$0xf]
        %v752 = vld [vmem:[#allocation5 + $0xc0] sm:$0xf]
        %v753 = vld [vmem:[#allocation5 + $0xd4] sm:$0xf]
        %v754 = vld [vmem:[#allocation5 + $0xe8] sm:$0xf]
        %v755 = vld [vmem:[#allocation5 + $0xfc] sm:$0xf]
        %v756 = vld [vmem:[#allocation5 + $0x110] sm:$0xf]
        %v757 = vld [vmem:[#allocation5 + $0x124] sm:$0xf]
        %v758 = vld [vmem:[#allocation5 + $0x138] sm:$0xf]
        %v759 = vld [vmem:[#allocation7 + $0x3] sm:$0x1]
        %v761 = vperm.slane %v759, 0
        %v779 = vunpack.c.l.b16 %v743
        %v780 = vunpack.c.l.b16 %v744
        %v781 = vunpack.c.l.b16 %v745
        %v782 = vunpack.c.l.b16 %v746
        %v783 = vunpack.c.l.b16 %v747
        %v784 = vunpack.c.l.b16 %v748
        %v785 = vunpack.c.l.b16 %v749
        %v786 = vunpack.c.l.b16 %v750
        %v787 = vunpack.c.l.b16 %v751
        %v788 = vunpack.c.l.b16 %v752
        %v789 = vunpack.c.l.b16 %v753
        %v790 = vunpack.c.l.b16 %v754
        %v791 = vunpack.c.l.b16 %v755
        %v792 = vunpack.c.l.b16 %v756
        %v793 = vunpack.c.l.b16 %v757
        %v794 = vunpack.c.l.b16 %v758
        %v795 = vpack.c.b16 %v780, %v779
        %v796 = vpack.c.b16 %v782, %v781
        %v797 = vpack.c.b16 %v784, %v783
        %v798 = vpack.c.b16 %v786, %v785
        %v799 = vpack.c.b16 %v788, %v787
        %v800 = vpack.c.b16 %v790, %v789
        %v801 = vpack.c.b16 %v792, %v791
        %v802 = vpack.c.b16 %v794, %v793
        %811 = vmatpush.bf16.msra.mxu0 %v802
        %812 = vmatpush.bf16.msra.mxu0 %v801
        %813 = vmatpush.bf16.msra.mxu0 %v800
        %814 = vmatpush.bf16.msra.mxu0 %v799
        %815 = vmatpush.bf16.msra.mxu0 %v798
        %816 = vmatpush.bf16.msra.mxu0 %v797
        %817 = vmatpush.bf16.msra.mxu0 %v796
        %818 = vmatpush.bf16.msra.mxu0 %v795
        %819 = vmatmul.bf16.gmra.mxu0 %v735
        %v820 = vpop.f32.mrf.mxu0
        %v821 = vadd.f32 %v761, %v820
        %v822 = vpop.f32.mrf.mxu0
        %v823 = vadd.f32 %v761, %v822
        %824 = vmatmul.bf16.gmra.mxu0 %v736
        %v825 = vpop.f32.mrf.mxu0
        %v826 = vadd.f32 %v761, %v825
        %v827 = vpop.f32.mrf.mxu0
        %v828 = vadd.f32 %v761, %v827
        %829 = vmatmul.bf16.gmra.mxu0 %v737
        %v830 = vpop.f32.mrf.mxu0
        %v831 = vadd.f32 %v761, %v830
        %v832 = vpop.f32.mrf.mxu0
        %v833 = vadd.f32 %v761, %v832
        %834 = vmatmul.bf16.gmra.mxu0 %v738
        %v835 = vpop.f32.mrf.mxu0
        %v836 = vadd.f32 %v761, %v835
        %v837 = vpop.f32.mrf.mxu0
        %v838 = vadd.f32 %v761, %v837
        %839 = vmatmul.bf16.gmra.mxu0 %v739
        %v840 = vpop.f32.mrf.mxu0
        %v841 = vadd.f32 %v761, %v840
        %v842 = vpop.f32.mrf.mxu0
        %v843 = vadd.f32 %v761, %v842
        %844 = vmatmul.bf16.gmra.mxu0 %v740
        %v845 = vpop.f32.mrf.mxu0
        %v846 = vadd.f32 %v761, %v845
        %v847 = vpop.f32.mrf.mxu0
        %v848 = vadd.f32 %v761, %v847
        %849 = vmatmul.bf16.gmra.mxu0 %v741
        %v850 = vpop.f32.mrf.mxu0
        %v851 = vadd.f32 %v761, %v850
        %v852 = vpop.f32.mrf.mxu0
        %v853 = vadd.f32 %v761, %v852
        %854 = vmatmul.bf16.gmra.mxu0 %v742
        %v855 = vpop.f32.mrf.mxu0
        %v856 = vadd.f32 %v761, %v855
        %v857 = vpop.f32.mrf.mxu0
        %v858 = vadd.f32 %v761, %v857
        %859 = vdwg.mxu0
        %v860 = vmax.f32 %v821, 0.0
        %v861 = vmax.f32 %v823, 0.0
        %v862 = vmax.f32 %v826, 0.0
        %v863 = vmax.f32 %v828, 0.0
        %v864 = vmax.f32 %v831, 0.0
        %v865 = vmax.f32 %v833, 0.0
        %v866 = vmax.f32 %v836, 0.0
        %v867 = vmax.f32 %v838, 0.0
        %v868 = vmax.f32 %v841, 0.0
        %v869 = vmax.f32 %v843, 0.0
        %v870 = vmax.f32 %v846, 0.0
        %v871 = vmax.f32 %v848, 0.0
        %v872 = vmax.f32 %v851, 0.0
        %v873 = vmax.f32 %v853, 0.0
        %v874 = vmax.f32 %v856, 0.0
        %v875 = vmax.f32 %v858, 0.0
        %v876 = vpack.c.bf16 %v861, %v860
        %v877 = vpack.c.bf16 %v863, %v862
        %v878 = vpack.c.bf16 %v865, %v864
        %v879 = vpack.c.bf16 %v867, %v866
        %v880 = vpack.c.bf16 %v869, %v868
        %v881 = vpack.c.bf16 %v871, %v870
        %v882 = vpack.c.bf16 %v873, %v872
        %v883 = vpack.c.bf16 %v875, %v874
        %v884 = vld [vmem:[#allocation5 + $0x10] sm:$0xf]
        %v885 = vld [vmem:[#allocation5 + $0x24] sm:$0xf]
        %v886 = vld [vmem:[#allocation5 + $0x38] sm:$0xf]
        %v887 = vld [vmem:[#allocation5 + $0x4c] sm:$0xf]
        %v888 = vld [vmem:[#allocation5 + $0x60] sm:$0xf]
        %v889 = vld [vmem:[#allocation5 + $0x74] sm:$0xf]
        %v890 = vld [vmem:[#allocation5 + $0x88] sm:$0xf]
        %v891 = vld [vmem:[#allocation5 + $0x9c] sm:$0xf]
        %v892 = vld [vmem:[#allocation5 + $0xb0] sm:$0xf]
        %v893 = vld [vmem:[#allocation5 + $0xc4] sm:$0xf]
        %v894 = vld [vmem:[#allocation5 + $0xd8] sm:$0xf]
        %v895 = vld [vmem:[#allocation5 + $0xec] sm:$0xf]
        %v896 = vld [vmem:[#allocation5 + $0x100] sm:$0xf]
        %v897 = vld [vmem:[#allocation5 + $0x114] sm:$0xf]
        %v898 = vld [vmem:[#allocation5 + $0x128] sm:$0xf]
        %v899 = vld [vmem:[#allocation5 + $0x13c] sm:$0xf]
        %v900 = vld [vmem:[#allocation7 + $0x4] sm:$0x1]
        %v902 = vperm.slane %v900, 0
        %v920 = vunpack.c.l.b16 %v884
        %v921 = vunpack.c.l.b16 %v885
        %v922 = vunpack.c.l.b16 %v886
        %v923 = vunpack.c.l.b16 %v887
        %v924 = vunpack.c.l.b16 %v888
        %v925 = vunpack.c.l.b16 %v889
        %v926 = vunpack.c.l.b16 %v890
        %v927 = vunpack.c.l.b16 %v891
        %v928 = vunpack.c.l.b16 %v892
        %v929 = vunpack.c.l.b16 %v893
        %v930 = vunpack.c.l.b16 %v894
        %v931 = vunpack.c.l.b16 %v895
        %v932 = vunpack.c.l.b16 %v896
        %v933 = vunpack.c.l.b16 %v897
        %v934 = vunpack.c.l.b16 %v898
        %v935 = vunpack.c.l.b16 %v899
        %v936 = vpack.c.b16 %v921, %v920
        %v937 = vpack.c.b16 %v923, %v922
        %v938 = vpack.c.b16 %v925, %v924
        %v939 = vpack.c.b16 %v927, %v926
        %v940 = vpack.c.b16 %v929, %v928
        %v941 = vpack.c.b16 %v931, %v930
        %v942 = vpack.c.b16 %v933, %v932
        %v943 = vpack.c.b16 %v935, %v934
        %952 = vmatpush.bf16.msra.mxu0 %v943
        %953 = vmatpush.bf16.msra.mxu0 %v942
        %954 = vmatpush.bf16.msra.mxu0 %v941
        %955 = vmatpush.bf16.msra.mxu0 %v940
        %956 = vmatpush.bf16.msra.mxu0 %v939
        %957 = vmatpush.bf16.msra.mxu0 %v938
        %958 = vmatpush.bf16.msra.mxu0 %v937
        %959 = vmatpush.bf16.msra.mxu0 %v936
        %960 = vmatmul.bf16.gmra.mxu0 %v876
        %v961 = vpop.f32.mrf.mxu0
        %v962 = vadd.f32 %v902, %v961
        %v963 = vpop.f32.mrf.mxu0
        %v964 = vadd.f32 %v902, %v963
        %965 = vmatmul.bf16.gmra.mxu0 %v877
        %v966 = vpop.f32.mrf.mxu0
        %v967 = vadd.f32 %v902, %v966
        %v968 = vpop.f32.mrf.mxu0
        %v969 = vadd.f32 %v902, %v968
        %970 = vmatmul.bf16.gmra.mxu0 %v878
        %v971 = vpop.f32.mrf.mxu0
        %v972 = vadd.f32 %v902, %v971
        %v973 = vpop.f32.mrf.mxu0
        %v974 = vadd.f32 %v902, %v973
        %975 = vmatmul.bf16.gmra.mxu0 %v879
        %v976 = vpop.f32.mrf.mxu0
        %v977 = vadd.f32 %v902, %v976
        %v978 = vpop.f32.mrf.mxu0
        %v979 = vadd.f32 %v902, %v978
        %980 = vmatmul.bf16.gmra.mxu0 %v880
        %v981 = vpop.f32.mrf.mxu0
        %v982 = vadd.f32 %v902, %v981
        %v983 = vpop.f32.mrf.mxu0
        %v984 = vadd.f32 %v902, %v983
        %985 = vmatmul.bf16.gmra.mxu0 %v881
        %v986 = vpop.f32.mrf.mxu0
        %v987 = vadd.f32 %v902, %v986
        %v988 = vpop.f32.mrf.mxu0
        %v989 = vadd.f32 %v902, %v988
        %990 = vmatmul.bf16.gmra.mxu0 %v882
        %v991 = vpop.f32.mrf.mxu0
        %v992 = vadd.f32 %v902, %v991
        %v993 = vpop.f32.mrf.mxu0
        %v994 = vadd.f32 %v902, %v993
        %995 = vmatmul.bf16.gmra.mxu0 %v883
        %v996 = vpop.f32.mrf.mxu0
        %v997 = vadd.f32 %v902, %v996
        %v998 = vpop.f32.mrf.mxu0
        %v999 = vadd.f32 %v902, %v998
        %1000 = vdwg.mxu0
        %1001 = vst [vmem:[%s221] sm:$0xff] %v962
        %1002 = vst [vmem:[%s221 + $0x8] sm:$0xff] %v964
        %1003 = vst [vmem:[%s221 + $0x10] sm:$0xff] %v967
        %1004 = vst [vmem:[%s221 + $0x18] sm:$0xff] %v969
        %1005 = vst [vmem:[%s221 + $0x20] sm:$0xff] %v972
        %1006 = vst [vmem:[%s221 + $0x28] sm:$0xff] %v974
        %1007 = vst [vmem:[%s221 + $0x30] sm:$0xff] %v977
        %1008 = vst [vmem:[%s221 + $0x38] sm:$0xff] %v979
        %1009 = vst [vmem:[%s221 + $0x40] sm:$0xff] %v982
        %1010 = vst [vmem:[%s221 + $0x48] sm:$0xff] %v984
        %1011 = vst [vmem:[%s221 + $0x50] sm:$0xff] %v987
        %1012 = vst [vmem:[%s221 + $0x58] sm:$0xff] %v989
        %1013 = vst [vmem:[%s221 + $0x60] sm:$0xff] %v992
        %1014 = vst [vmem:[%s221 + $0x68] sm:$0xff] %v994
        %1015 = vst [vmem:[%s221 + $0x70] sm:$0xff] %v997
        %1016 = vst [vmem:[%s221 + $0x78] sm:$0xff] %v999
        %s1017 = sand.u32 %s97, 1
        %s1018 = scalar_lea.sflag [#allocation4], %s1017
        %s1019 = sand.u32 %s97, 1
        %s1020 = smul.addr %s1019, 128
        %s1021 = scalar_lea.vmem [#allocation8], %s1020
        // Predicated region
        $region45: #{tpu_custom_call.1} parent=31 // pred_check
          %p1022 = pneg %p107
        $region46: #{tpu_custom_call.1} parent=31 // pred_check_branch
          %1024 = sbr.rel (%p1022) target = $region48
        $region47: #{tpu_custom_call.1} parent=31 // pred_region
          %s1025 = smul.u32 16, %s21
          %1027 = vsyncadd %s1018, 0
          %s1028 = smul.addr %s1025, 8
          %s1029 = scalar_lea.hbm %s3, %s1028
          %s1030 = sshll.u32 %s1021, 4
          %s1031 = int_to_ptr.vmem [resolvable:$true] %s1030
          %s1032 = sshll.u32 %s1029, 4
          %s1033 = int_to_ptr.hbm [resolvable:$true] %s1032
          %1038 = dma.vmem_to_hbm [thread:$0]  %s1031, 2048, %s1033, %s1018, 128, 128, 8
        $region48: #{tpu_custom_call.1} parent=31 // pred_fallthru
          _
      $region32: #{tpu_custom_call.1} parent=5 // pred_fallthru
        _
      %p1039 = scmp.le.s32.totalorder 2, %s16
      // Predicated region
      $region49: #{tpu_custom_call.1} parent=5 // pred_check
        %p1040 = pneg %p1039
      $region50: #{tpu_custom_call.1} parent=5 // pred_check_branch
        %1042 = sbr.rel (%p1040) target = $region52
      $region51: #{tpu_custom_call.1} parent=5 // pred_region
        %s1043 = ssub.s32 %s16, 2
        // Predicated region
        $region53: #{tpu_custom_call.1} parent=51 // pred_check
          %p1044 = pneg %p113
        $region54: #{tpu_custom_call.1} parent=51 // pred_check_branch
          %1046 = sbr.rel (%p1044) target = $region56
        $region55: #{tpu_custom_call.1} parent=51 // pred_region
          %s1047 = sand.u32 %s98, 1
          %s1048 = scalar_lea.sflag [#allocation4], %s1047
          %s1049 = sand.u32 %s98, 1
          %s1050 = smul.addr %s1049, 128
          %s1051 = scalar_lea.vmem [#allocation8], %s1050
          %1053 = dma.done %s1048, 2048
        $region56: #{tpu_custom_call.1} parent=51 // pred_fallthru
          _
      $region52: #{tpu_custom_call.1} parent=5 // pred_fallthru
        _
    $region6: #{tpu_custom_call.1} parent=1 // loop_footer
      %s20 = sadd.s32 1, %s16
    $region7: #{tpu_custom_call.1} parent=1 // loop_footer_branch
      %15 = sbr.rel target = $region3
    $region8: #{tpu_custom_call.1} parent=1 // loop_exit
      _
    %1054 = vsyncpa [#allocation3], 1
    %s1055 = scalar_lea.sflag [#allocation3], 1
    %1056 = vsyncpa %s1055, 1
    %1057 = vsyncpa [#allocation6], 1
    %1058 = vsyncpa [#allocation4], 1
    %s1059 = scalar_lea.sflag [#allocation4], 1
    %1060 = vsyncpa %s1059, 1

</llo_original>
